<compile_context>
chip_gen: v7x
topology: tpu7x:2x2x1
jax: 0.10.0
libtpu: 0.0.40
codegen_flags: <defaults>
</compile_context>

<pallas_src>
import functools

import jax
import jax.numpy as jnp
from jax import lax
from jax.experimental import pallas as pl
from jax.experimental.pallas import tpu as pltpu

LANE = 128      # lane width: all feature dims are zero-padded to this
SUBLANE = 8     # sublane width: batch is padded to a multiple of this

N_LAYERS = 3                    # 2 hidden layers + output (specialized)
_W_SLAB_ROWS = N_LAYERS * LANE  # (384, 128) bf16 weight slab
_B_SLAB_ROWS = SUBLANE          # (8, 128) f32 bias slab (rows 0..2 used)


def _round_up(x, m):
    return (x + m - 1) // m * m


# ----------------------------------------------------------------------------
# Kernel bodies
# ----------------------------------------------------------------------------

def _load_params(w_ref, b_ref):
    """Load all weight tiles (bf16, 8 vregs each) and bias rows (f32) once."""
    ws = tuple(w_ref[pl.ds(l * LANE, LANE), :] for l in range(N_LAYERS))
    bs = tuple(b_ref[pl.ds(l, 1), :] for l in range(N_LAYERS))
    return ws, bs


def _mlp_body(y, ws, bs):
    """One vector-field evaluation on a lane-padded state tile (tb, 128).

    bf16 dot inputs (MXU-native on v6e/v7x), f32 accumulation, f32 bias/tanh.
    Zero padding is exact: padded weight columns and bias lanes are zero and
    tanh(0) = 0, so padded lanes stay identically zero end-to-end.
    """
    h = jnp.tanh(jnp.dot(y.astype(jnp.bfloat16), ws[0],
                         preferred_element_type=jnp.float32) + bs[0])
    h = jnp.tanh(jnp.dot(h.astype(jnp.bfloat16), ws[1],
                         preferred_element_type=jnp.float32) + bs[1])
    return jnp.dot(h.astype(jnp.bfloat16), ws[2],
                   preferred_element_type=jnp.float32) + bs[2]


def _mlp_kernel(y_ref, w_ref, b_ref, o_ref):
    # Single dy/dt evaluation (== MLP.forward) on one batch tile.
    ws, bs = _load_params(w_ref, b_ref)
    o_ref[...] = _mlp_body(y_ref[...], ws, bs).astype(o_ref.dtype)


def _mlp_euler_kernel(y_ref, w_ref, b_ref, o_ref, *, n_steps, dt, unroll):
    # Fused explicit-Euler integration: n_steps vector-field evals in one
    # kernel. Parameters are read from VMEM once (hoisted out of the loop),
    # the state lives in vregs, and the loop is unrolled for LLO visibility.
    ws, bs = _load_params(w_ref, b_ref)

    def step(_, y):
        return y + dt * _mlp_body(y, ws, bs)

    y = lax.fori_loop(0, n_steps, step, y_ref[...], unroll=unroll)
    o_ref[...] = y.astype(o_ref.dtype)


# ----------------------------------------------------------------------------
# Host-side packing / wrappers
# ----------------------------------------------------------------------------

def init_mlp_params(key, input_dim, hidden_dims, output_dim):
    """nn.Linear-style init (uniform +/- 1/sqrt(fan_in)); W stored (in, out)."""
    dims = [input_dim] + list(hidden_dims) + [output_dim]
    params = []
    for i in range(len(dims) - 1):
        fan_in, fan_out = dims[i], dims[i + 1]
        key, kw, kb = jax.random.split(key, 3)
        bound = 1.0 / jnp.sqrt(float(fan_in))
        w = jax.random.uniform(kw, (fan_in, fan_out), jnp.float32, -bound, bound)
        b = jax.random.uniform(kb, (fan_out,), jnp.float32, -bound, bound)
        params.append((w, b))
    return params


def pack_params(params):
    """Pack 3 (W, b) pairs into a bf16 weight slab (384,128) + f32 bias slab (8,128)."""
    assert len(params) == N_LAYERS, "kernel is specialized to 2 hidden layers + output"
    w_slab = jnp.zeros((_W_SLAB_ROWS, LANE), jnp.bfloat16)
    b_slab = jnp.zeros((_B_SLAB_ROWS, LANE), jnp.float32)
    dims = []
    for l, (w, b) in enumerate(params):
        fi, fo = w.shape
        assert fi <= LANE and fo <= LANE
        w_slab = w_slab.at[l * LANE:l * LANE + fi, :fo].set(w.astype(jnp.bfloat16))
        b_slab = b_slab.at[l, :fo].set(b.reshape(-1).astype(jnp.float32))
        dims.append((fi, fo))
    return w_slab, b_slab, tuple(dims)


def _pad_state(y, max_tile):
    """Pad state to (bp, 128) f32 with bp a multiple of the chosen batch tile."""
    if y.ndim == 1:
        y = y[None, :]          # matches y.unsqueeze(0)
    batch, dim = y.shape
    tb = min(_round_up(max(batch, 1), SUBLANE), max_tile)
    bp = _round_up(max(batch, 1), tb)
    y_pad = jnp.zeros((bp, LANE), jnp.float32).at[:batch, :dim].set(
        y.astype(jnp.float32))
    return y_pad, batch, tb


def _cost(bp, w_slab, b_slab, n_steps=1):
    # Count padded (128-wide) work actually executed on the MXU/EUP.
    flops = 2 * bp * N_LAYERS * LANE * LANE * n_steps
    transc = bp * (N_LAYERS - 1) * LANE * n_steps
    bytes_acc = (w_slab.size * w_slab.dtype.itemsize
                 + b_slab.size * 4 + 2 * bp * LANE * 4)
    return pl.CostEstimate(flops=int(flops), transcendentals=int(transc),
                           bytes_accessed=int(bytes_acc))


def _grid_spec(tb, bp):
    return pltpu.PrefetchScalarGridSpec(
        num_scalar_prefetch=0,
        grid=(bp // tb,),
        in_specs=[
            pl.BlockSpec((tb, LANE), lambda i: (i, 0)),             # state tile
            pl.BlockSpec((_W_SLAB_ROWS, LANE), lambda i: (0, 0)),   # weights (resident)
            pl.BlockSpec((_B_SLAB_ROWS, LANE), lambda i: (0, 0)),   # biases  (resident)
        ],
        out_specs=pl.BlockSpec((tb, LANE), lambda i: (i, 0)),
    )


_PARALLEL = pltpu.CompilerParams(dimension_semantics=("parallel",))


def mlp_forward(t, y, packed):
    """Pallas-backed MLP vector field (single dy/dt eval, Neural ODE API)."""
    del t  # unused, as in the PyTorch forward
    w_slab, b_slab, dims = packed
    out_dim = dims[-1][1]
    y_pad, batch, tb = _pad_state(y, max_tile=512)
    bp = y_pad.shape[0]
    out_pad = pl.pallas_call(
        _mlp_kernel,
        out_shape=jax.ShapeDtypeStruct((bp, LANE), jnp.float32),
        grid_spec=_grid_spec(tb, bp),
        compiler_params=_PARALLEL,
        cost_estimate=_cost(bp, w_slab, b_slab),
    )(y_pad, w_slab, b_slab)
    return out_pad[:batch, :out_dim]


def mlp_integrate_euler(y0, packed, *, n_steps, dt):
    """n_steps explicit-Euler steps of dy/dt = MLP(y) fused into one kernel."""
    w_slab, b_slab, dims = packed
    out_dim = dims[-1][1]
    assert dims[0][0] == out_dim, "ODE needs input_dim == output_dim"
    y_pad, batch, tb = _pad_state(y0, max_tile=64)  # small tile: keep vreg pressure low
    bp = y_pad.shape[0]
    unroll = max(1, min(8, int(n_steps)))
    kernel = functools.partial(_mlp_euler_kernel, n_steps=int(n_steps),
                               dt=float(dt), unroll=unroll)
    out_pad = pl.pallas_call(
        kernel,
        out_shape=jax.ShapeDtypeStruct((bp, LANE), jnp.float32),
        grid_spec=_grid_spec(tb, bp),
        compiler_params=_PARALLEL,
        cost_estimate=_cost(bp, w_slab, b_slab, n_steps=n_steps),
    )(y_pad, w_slab, b_slab)
    return out_pad[:batch, :out_dim]


# ----------------------------------------------------------------------------
# Pure-JAX references
# ----------------------------------------------------------------------------

def mlp_reference(t, y, params, *, emulate_bf16=False):
    """Reference MLP. emulate_bf16=True mirrors the kernel's bf16 dot inputs."""
    del t
    if y.ndim == 1:
        y = y[None, :]
    h = y.astype(jnp.float32)
    for i, (w, b) in enumerate(params):
        if emulate_bf16:
            z = jnp.dot(h.astype(jnp.bfloat16), w.astype(jnp.bfloat16),
                        preferred_element_type=jnp.float32) + b
        else:
            z = h @ w + b
        h = jnp.tanh(z) if i < len(params) - 1 else z
    return h


def euler_reference(y0, params, n_steps, dt, *, emulate_bf16=False):
    y = y0 if y0.ndim == 2 else y0[None, :]
    y = y.astype(jnp.float32)
    for _ in range(n_steps):
        y = y + dt * mlp_reference(None, y, params, emulate_bf16=emulate_bf16)
    return y


if __name__ == "__main__":
    # Forward-implied small shapes: state_dim=4, hidden_dims=[32, 32], batch=2.
    input_dim = 4
    hidden_dims = [32, 32]
    output_dim = 4
    batch = 2

    key = jax.random.PRNGKey(0)
    key_y, key_p = jax.random.split(key)

    y = jax.random.normal(key_y, (batch, input_dim), dtype=jnp.float32)
    t = jnp.float32(0.0)  # scalar time point (unused by the MLP, as in PyTorch)

    params = init_mlp_params(key_p, input_dim, hidden_dims, output_dim)
    packed = pack_params(params)  # one-time packing: weights DMA'd as one bf16 slab

    # 1) Single vector-field evaluation (== MLP.forward).
    out = jax.block_until_ready(mlp_forward(t, y, packed))
    ref_bf16 = mlp_reference(t, y, params, emulate_bf16=True)
    ref_f32 = mlp_reference(t, y, params, emulate_bf16=False)
    assert out.shape == (batch, output_dim)
    assert jnp.allclose(out, ref_bf16, atol=1e-4, rtol=1e-4), "mismatch vs bf16 reference"
    # Loose semantic check vs. the pure-f32 PyTorch-equivalent math (bf16 weights).
    assert jnp.allclose(out, ref_f32, atol=1e-1), "mismatch vs f32 reference"

    # 1b) 1-D input path (y.unsqueeze(0) equivalence).
    out1 = jax.block_until_ready(mlp_forward(t, y[0], packed))
    assert out1.shape == (1, output_dim)
    assert jnp.allclose(out1, ref_bf16[:1], atol=1e-4, rtol=1e-4), "1-D path mismatch"

    # 2) Fused ODE integration: 64 dy/dt evals in ONE pallas_call.
    n_steps, dt = 64, 0.01
    traj = jax.block_until_ready(mlp_integrate_euler(y, packed, n_steps=n_steps, dt=dt))
    traj_ref = euler_reference(y, params, n_steps, dt, emulate_bf16=True)
    assert traj.shape == (batch, output_dim)
    assert jnp.allclose(traj, traj_ref, atol=1e-3, rtol=1e-3), "Euler fusion mismatch"

    print("KERNEL_OK")
</pallas_src>

<mosaic_0001>
module attributes {stable_mosaic.version = 11 : i64} {
  func.func @_mlp_kernel(%arg0: i32, %arg1: memref<8x128xf32, #tpu.memory_space<vmem>>, %arg2: memref<384x128xbf16, #tpu.memory_space<vmem>>, %arg3: memref<8x128xf32, #tpu.memory_space<vmem>>, %arg4: memref<8x128xf32, #tpu.memory_space<vmem>>) attributes {dimension_semantics = [#tpu.dimension_semantics<parallel>], iteration_bounds = array<i64: 1>, scalar_prefetch = 0 : i64, scratch_operands = 0 : i64, tpu.core_type = #tpu.core_type<tc>, window_params = [{transform_indices = @transform_0, window_bounds = array<i64: 8, 128>}, {pipeline_mode = #tpu.pipeline_mode<synchronous>, transform_indices = @transform_1, window_bounds = array<i64: 384, 128>}, {pipeline_mode = #tpu.pipeline_mode<synchronous>, transform_indices = @transform_2, window_bounds = array<i64: 8, 128>}, {transform_indices = @transform_3, window_bounds = array<i64: 8, 128>}]} {
    %c0 = arith.constant 0 : index
    %c0_0 = arith.constant 0 : index
    %0 = vector.load %arg2[%c0, %c0_0] : memref<384x128xbf16, #tpu.memory_space<vmem>>, vector<128x128xbf16>
    %c128 = arith.constant 128 : index
    %c0_1 = arith.constant 0 : index
    %1 = vector.load %arg2[%c128, %c0_1] : memref<384x128xbf16, #tpu.memory_space<vmem>>, vector<128x128xbf16>
    %c256 = arith.constant 256 : index
    %c0_2 = arith.constant 0 : index
    %2 = vector.load %arg2[%c256, %c0_2] : memref<384x128xbf16, #tpu.memory_space<vmem>>, vector<128x128xbf16>
    %c0_3 = arith.constant 0 : index
    %c0_4 = arith.constant 0 : index
    %3 = vector.load %arg3[%c0_3, %c0_4] : memref<8x128xf32, #tpu.memory_space<vmem>>, vector<1x128xf32>
    %c1 = arith.constant 1 : index
    %c0_5 = arith.constant 0 : index
    %4 = vector.load %arg3[%c1, %c0_5] : memref<8x128xf32, #tpu.memory_space<vmem>>, vector<1x128xf32>
    %c2 = arith.constant 2 : index
    %c0_6 = arith.constant 0 : index
    %5 = vector.load %arg3[%c2, %c0_6] : memref<8x128xf32, #tpu.memory_space<vmem>>, vector<1x128xf32>
    %c0_7 = arith.constant 0 : index
    %c0_8 = arith.constant 0 : index
    %6 = vector.load %arg1[%c0_7, %c0_8] : memref<8x128xf32, #tpu.memory_space<vmem>>, vector<8x128xf32>
    %7 = arith.truncf %6 : vector<8x128xf32> to vector<8x128xbf16>
    %cst = arith.constant dense<0.000000e+00> : vector<8x128xf32>
    %8 = tpu.matmul %7, %0, %cst {dimension_numbers = #tpu.dot_dimension_numbers<[1], [0], [0], [1], [0, 0, 1, 1], [], []>} : vector<8x128xbf16>, vector<128x128xbf16>, vector<8x128xf32> -> vector<8x128xf32>
    %9 = vector.broadcast %3 : vector<1x128xf32> to vector<8x128xf32>
    %10 = arith.addf %8, %9 : vector<8x128xf32>
    %11 = math.tanh %10 : vector<8x128xf32>
    %12 = arith.truncf %11 : vector<8x128xf32> to vector<8x128xbf16>
    %cst_9 = arith.constant dense<0.000000e+00> : vector<8x128xf32>
    %13 = tpu.matmul %12, %1, %cst_9 {dimension_numbers = #tpu.dot_dimension_numbers<[1], [0], [0], [1], [0, 0, 1, 1], [], []>} : vector<8x128xbf16>, vector<128x128xbf16>, vector<8x128xf32> -> vector<8x128xf32>
    %14 = vector.broadcast %4 : vector<1x128xf32> to vector<8x128xf32>
    %15 = arith.addf %13, %14 : vector<8x128xf32>
    %16 = math.tanh %15 : vector<8x128xf32>
    %17 = arith.truncf %16 : vector<8x128xf32> to vector<8x128xbf16>
    %cst_10 = arith.constant dense<0.000000e+00> : vector<8x128xf32>
    %18 = tpu.matmul %17, %2, %cst_10 {dimension_numbers = #tpu.dot_dimension_numbers<[1], [0], [0], [1], [0, 0, 1, 1], [], []>} : vector<8x128xbf16>, vector<128x128xbf16>, vector<8x128xf32> -> vector<8x128xf32>
    %19 = vector.broadcast %5 : vector<1x128xf32> to vector<8x128xf32>
    %20 = arith.addf %18, %19 : vector<8x128xf32>
    %c0_11 = arith.constant 0 : index
    %c0_12 = arith.constant 0 : index
    %21 = vector.load %arg4[%c0_11, %c0_12] : memref<8x128xf32, #tpu.memory_space<vmem>>, vector<8x128xf32>
    tpu.vector_store %arg4[%c0_11, %c0_12], %20 {strides = array<i32>} : memref<8x128xf32, #tpu.memory_space<vmem>>, vector<8x128xf32>,
    return
  }
  func.func @transform_0(%arg0: i32) -> (i32, i32) {
    %c0_i32 = arith.constant 0 : i32
    %c0_i32_0 = arith.constant 0 : i32
    return %arg0, %c0_i32 : i32, i32
  }
  func.func @transform_1(%arg0: i32) -> (i32, i32) {
    %c0_i32 = arith.constant 0 : i32
    %c0_i32_0 = arith.constant 0 : i32
    %c0_i32_1 = arith.constant 0 : i32
    return %c0_i32, %c0_i32_0 : i32, i32
  }
  func.func @transform_2(%arg0: i32) -> (i32, i32) {
    %c0_i32 = arith.constant 0 : i32
    %c0_i32_0 = arith.constant 0 : i32
    %c0_i32_1 = arith.constant 0 : i32
    return %c0_i32, %c0_i32_0 : i32, i32
  }
  func.func @transform_3(%arg0: i32) -> (i32, i32) {
    %c0_i32 = arith.constant 0 : i32
    %c0_i32_0 = arith.constant 0 : i32
    return %arg0, %c0_i32 : i32, i32
  }
}

</mosaic_0001>

<llo_original>
// kernel: tpu_custom_call.1
$region0: #{tpu_custom_call.1}
  #allocation0 [shape = 'u32[]', space=smem, size = 0x4, offset = 0x4, fixed_abs, tag = 'smem constant byte address 0x4 - core index']
  #allocation1 [shape = 'u32[144,128]{1,0:T(1,128)}', space=vmem, size = 0x12000, scoped, tag = 'internal scratch']
  %s0 = inlined_call_operand.hbm [shape: f32[8,128], index: 0, kind: input, shape index: {}]
  %s1 = inlined_call_operand.hbm [shape: bf16[384,128], index: 1, kind: input, shape index: {}]
  %s2 = inlined_call_operand.hbm [shape: f32[8,128], index: 2, kind: input, shape index: {}]
  %s3 = inlined_call_operand.hbm [shape: f32[8,128], index: 3, kind: output, shape index: {}]
  %s4 = sld [smem:[#allocation0]]
  $region34: #{tpu_custom_call.1} parent=0
    _
  %s6 = ssub.s32 1, %s4
  %s7 = scalar_select 0, %s6, %s4
  $region1: #{tpu_custom_call.1} parent=0
    #allocation2 [shape = 'u8[4096]{0}', space=vmem, size = 0x1000, scoped, tag = 'input window, operand 0, single buffered']
    #allocation3 [shape = 's32[1]{0}', space=sflag, size = 0x4, scoped, tag = 'scoped memory for tpu_custom_call.1']
    #allocation4 [shape = 's32[1]{0}', space=sflag, size = 0x4, scoped, tag = 'scoped memory for tpu_custom_call.1']
    #allocation5 [shape = 'u8[98304]{0}', space=vmem, size = 0x18000, scoped, tag = 'input window, operand 1, single buffered']
    #allocation6 [shape = 's32[1]{0}', space=sflag, size = 0x4, scoped, tag = 'scoped memory for tpu_custom_call.1']
    #allocation7 [shape = 'u8[4096]{0}', space=vmem, size = 0x1000, scoped, tag = 'input window, operand 2, single buffered']
    #allocation8 [shape = 'u8[4096]{0}', space=vmem, size = 0x1000, scoped, tag = 'output window, operand 0, single buffered']
    %8 = vsyncpa [#allocation3], 0
    %9 = vsyncpa [#allocation6], 0
    %10 = vsyncpa [#allocation4], 0
    // Predicated region
    $region2: #{tpu_custom_call.1} parent=1 // pred_check
      _
    $region3: #{tpu_custom_call.1} parent=1 // pred_check_branch
      %12 = sbr.rel (0) target = $region5
    $region4: #{tpu_custom_call.1} parent=1 // pred_region
      %s14 = ssub.s32 128, 128
      %15 = vsyncadd [#allocation3], %s14
      %s17 = sshll.u32 [#allocation2], 4
      %s18 = int_to_ptr.vmem [resolvable:$true] %s17
      %20 = dma.hbm_to_vmem [thread:$0]  %s0, 128, %s18, [#allocation3]
    $region5: #{tpu_custom_call.1} parent=1 // pred_fallthru
      _
    // Predicated region
    $region6: #{tpu_custom_call.1} parent=1 // pred_check
      _
    $region7: #{tpu_custom_call.1} parent=1 // pred_check_branch
      %22 = sbr.rel (0) target = $region9
    $region8: #{tpu_custom_call.1} parent=1 // pred_region
      %s24 = ssub.s32 3072, 3072
      %25 = vsyncadd [#allocation6], %s24
      %s26 = sshll.u32 [#allocation5], 4
      %s27 = int_to_ptr.vmem [resolvable:$true] %s26
      %32 = dma.hbm_to_vmem [thread:$0]  %s1, 3072, %s27, [#allocation6], 64, 64, 4
    $region9: #{tpu_custom_call.1} parent=1 // pred_fallthru
      _
    // Predicated region
    $region10: #{tpu_custom_call.1} parent=1 // pred_check
      _
    $region11: #{tpu_custom_call.1} parent=1 // pred_check_branch
      %34 = sbr.rel (0) target = $region13
    $region12: #{tpu_custom_call.1} parent=1 // pred_region
      %s36 = ssub.s32 128, 128
      %37 = vsyncadd [#allocation6], %s36
      %s39 = sshll.u32 [#allocation7], 4
      %s40 = int_to_ptr.vmem [resolvable:$true] %s39
      %42 = dma.hbm_to_vmem [thread:$0]  %s2, 128, %s40, [#allocation6]
    $region13: #{tpu_custom_call.1} parent=1 // pred_fallthru
      _
    // Predicated region
    $region14: #{tpu_custom_call.1} parent=1 // pred_check
      _
    $region15: #{tpu_custom_call.1} parent=1 // pred_check_branch
      %44 = sbr.rel (0) target = $region17
    $region16: #{tpu_custom_call.1} parent=1 // pred_region
      %45 = dma.done [#allocation3], 128
    $region17: #{tpu_custom_call.1} parent=1 // pred_fallthru
      _
    // Predicated region
    $region18: #{tpu_custom_call.1} parent=1 // pred_check
      _
    $region19: #{tpu_custom_call.1} parent=1 // pred_check_branch
      %47 = sbr.rel (0) target = $region21
    $region20: #{tpu_custom_call.1} parent=1 // pred_region
      %48 = dma.done [#allocation6], 3072
    $region21: #{tpu_custom_call.1} parent=1 // pred_fallthru
      _
    // Predicated region
    $region22: #{tpu_custom_call.1} parent=1 // pred_check
      _
    $region23: #{tpu_custom_call.1} parent=1 // pred_check_branch
      %50 = sbr.rel (0) target = $region25
    $region24: #{tpu_custom_call.1} parent=1 // pred_region
      %51 = dma.done [#allocation6], 128
    $region25: #{tpu_custom_call.1} parent=1 // pred_fallthru
      _
    %v53 = vld [vmem:[#allocation5] sm:$0xf]
    %v54 = vld [vmem:[#allocation5 + $0x4] sm:$0xf]
    %v55 = vld [vmem:[#allocation5 + $0x8] sm:$0xf]
    %v56 = vld [vmem:[#allocation5 + $0xc] sm:$0xf]
    %v57 = vld [vmem:[#allocation5 + $0x10] sm:$0xf]
    %v58 = vld [vmem:[#allocation5 + $0x14] sm:$0xf]
    %v59 = vld [vmem:[#allocation5 + $0x18] sm:$0xf]
    %v60 = vld [vmem:[#allocation5 + $0x1c] sm:$0xf]
    %v61 = vld [vmem:[#allocation5 + $0x20] sm:$0xf]
    %v62 = vld [vmem:[#allocation5 + $0x24] sm:$0xf]
    %v63 = vld [vmem:[#allocation5 + $0x28] sm:$0xf]
    %v64 = vld [vmem:[#allocation5 + $0x2c] sm:$0xf]
    %v65 = vld [vmem:[#allocation5 + $0x30] sm:$0xf]
    %v66 = vld [vmem:[#allocation5 + $0x34] sm:$0xf]
    %v67 = vld [vmem:[#allocation5 + $0x38] sm:$0xf]
    %v68 = vld [vmem:[#allocation5 + $0x3c] sm:$0xf]
    %v69 = vld [vmem:[#allocation5 + $0x40] sm:$0xf]
    %v70 = vld [vmem:[#allocation5 + $0x44] sm:$0xf]
    %v71 = vld [vmem:[#allocation5 + $0x48] sm:$0xf]
    %v72 = vld [vmem:[#allocation5 + $0x4c] sm:$0xf]
    %v73 = vld [vmem:[#allocation5 + $0x50] sm:$0xf]
    %v74 = vld [vmem:[#allocation5 + $0x54] sm:$0xf]
    %v75 = vld [vmem:[#allocation5 + $0x58] sm:$0xf]
    %v76 = vld [vmem:[#allocation5 + $0x5c] sm:$0xf]
    %v77 = vld [vmem:[#allocation5 + $0x60] sm:$0xf]
    %v78 = vld [vmem:[#allocation5 + $0x64] sm:$0xf]
    %v79 = vld [vmem:[#allocation5 + $0x68] sm:$0xf]
    %v80 = vld [vmem:[#allocation5 + $0x6c] sm:$0xf]
    %v81 = vld [vmem:[#allocation5 + $0x70] sm:$0xf]
    %v82 = vld [vmem:[#allocation5 + $0x74] sm:$0xf]
    %v83 = vld [vmem:[#allocation5 + $0x78] sm:$0xf]
    %v84 = vld [vmem:[#allocation5 + $0x7c] sm:$0xf]
    %v85 = vld [vmem:[#allocation5 + $0x80] sm:$0xf]
    %v86 = vld [vmem:[#allocation5 + $0x84] sm:$0xf]
    %v87 = vld [vmem:[#allocation5 + $0x88] sm:$0xf]
    %v88 = vld [vmem:[#allocation5 + $0x8c] sm:$0xf]
    %v89 = vld [vmem:[#allocation5 + $0x90] sm:$0xf]
    %v90 = vld [vmem:[#allocation5 + $0x94] sm:$0xf]
    %v91 = vld [vmem:[#allocation5 + $0x98] sm:$0xf]
    %v92 = vld [vmem:[#allocation5 + $0x9c] sm:$0xf]
    %v93 = vld [vmem:[#allocation5 + $0xa0] sm:$0xf]
    %v94 = vld [vmem:[#allocation5 + $0xa4] sm:$0xf]
    %v95 = vld [vmem:[#allocation5 + $0xa8] sm:$0xf]
    %v96 = vld [vmem:[#allocation5 + $0xac] sm:$0xf]
    %v97 = vld [vmem:[#allocation5 + $0xb0] sm:$0xf]
    %v98 = vld [vmem:[#allocation5 + $0xb4] sm:$0xf]
    %v99 = vld [vmem:[#allocation5 + $0xb8] sm:$0xf]
    %v100 = vld [vmem:[#allocation5 + $0xbc] sm:$0xf]
    %v101 = vld [vmem:[#allocation7] sm:$0x1]
    %v102 = vld [vmem:[#allocation7 + $0x1] sm:$0x1]
    %v103 = vld [vmem:[#allocation7 + $0x2] sm:$0x1]
    %v104 = vld [vmem:[#allocation2] sm:$0xff]
    %v105 = vpack.c.bf16 %v104, %v104
    %v106 = vlaneseq
    %v107 = vshrl.u32 %v106, 7
    %v108 = vsub.s32 0, %v107
    %v109 = vrot.slane %v101, %v108
    %v126 = vunpack.c.l.b16 %v53
    %v127 = vunpack.c.l.b16 %v54
    %v128 = vunpack.c.l.b16 %v55
    %v129 = vunpack.c.l.b16 %v56
    %v130 = vunpack.c.l.b16 %v57
    %v131 = vunpack.c.l.b16 %v58
    %v132 = vunpack.c.l.b16 %v59
    %v133 = vunpack.c.l.b16 %v60
    %v134 = vunpack.c.l.b16 %v61
    %v135 = vunpack.c.l.b16 %v62
    %v136 = vunpack.c.l.b16 %v63
    %v137 = vunpack.c.l.b16 %v64
    %v138 = vunpack.c.l.b16 %v65
    %v139 = vunpack.c.l.b16 %v66
    %v140 = vunpack.c.l.b16 %v67
    %v141 = vunpack.c.l.b16 %v68
    %v142 = vpack.c.b16 %v127, %v126
    %v143 = vpack.c.b16 %v129, %v128
    %v144 = vpack.c.b16 %v131, %v130
    %v145 = vpack.c.b16 %v133, %v132
    %v146 = vpack.c.b16 %v135, %v134
    %v147 = vpack.c.b16 %v137, %v136
    %v148 = vpack.c.b16 %v139, %v138
    %v149 = vpack.c.b16 %v141, %v140
    %158 = vmatprep.subr.bf16.mxu0 0
    %159 = vmatpush1.bf16.msra.mxu0 %v142
    %160 = vmatprep.subr.bf16.mxu0 0
    %161 = vmatpush1.bf16.msra.mxu0 %v143
    %162 = vmatprep.subr.bf16.mxu0 0
    %163 = vmatpush1.bf16.msra.mxu0 %v144
    %164 = vmatprep.subr.bf16.mxu0 0
    %165 = vmatpush1.bf16.msra.mxu0 %v145
    %166 = vmatprep.subr.bf16.mxu0 0
    %167 = vmatpush1.bf16.msra.mxu0 %v146
    %168 = vmatprep.subr.bf16.mxu0 0
    %169 = vmatpush1.bf16.msra.mxu0 %v147
    %170 = vmatprep.subr.bf16.mxu0 0
    %171 = vmatpush1.bf16.msra.mxu0 %v148
    %172 = vmatprep.subr.bf16.mxu0 0
    %173 = vmatpush1.bf16.msra.mxu0 %v149
    %174 = vmatprep.subr.bf16.mxu0 0
    %175 = vmatpush1.bf16.msra.mxu0 0
    %176 = vmatprep.subr.bf16.mxu0 0
    %177 = vmatpush1.bf16.msra.mxu0 0
    %178 = vmatprep.subr.bf16.mxu0 0
    %179 = vmatpush1.bf16.msra.mxu0 0
    %180 = vmatprep.subr.bf16.mxu0 0
    %181 = vmatpush1.bf16.msra.mxu0 0
    %182 = vmatprep.subr.bf16.mxu0 0
    %183 = vmatpush1.bf16.msra.mxu0 0
    %184 = vmatprep.subr.bf16.mxu0 0
    %185 = vmatpush1.bf16.msra.mxu0 0
    %186 = vmatprep.subr.bf16.mxu0 0
    %187 = vmatpush1.bf16.msra.mxu0 0
    %188 = vmatprep.subr.bf16.mxu0 0
    %189 = vmatpush1.bf16.msra.mxu0 0
    %190 = vmatprep.mubr.bf16.mxu0 0
    %191 = vmatmul.mubr.bf16.gmra.mrb[0].mxu0 %v105
    %v192 = vpop.f32.mrb[0].mxu0
    %v193 = vadd.f32 %v109, %v192
    %v194 = vpop.f32.mrb[0].mxu0
    %v195 = vpop.f32.mrb[0].mxu0
    %v196 = vpop.f32.mrb[0].mxu0
    %197 = vdwg.mxu0
    %v198 = vtanh.pop %v193
    %v199 = vpack.c.bf16 %v198, %v198
    %v200 = vlaneseq
    %v201 = vshrl.u32 %v200, 7
    %v202 = vsub.s32 0, %v201
    %v203 = vrot.slane %v102, %v202
    %v220 = vunpack.c.l.b16 %v69
    %v221 = vunpack.c.l.b16 %v70
    %v222 = vunpack.c.l.b16 %v71
    %v223 = vunpack.c.l.b16 %v72
    %v224 = vunpack.c.l.b16 %v73
    %v225 = vunpack.c.l.b16 %v74
    %v226 = vunpack.c.l.b16 %v75
    %v227 = vunpack.c.l.b16 %v76
    %v228 = vunpack.c.l.b16 %v77
    %v229 = vunpack.c.l.b16 %v78
    %v230 = vunpack.c.l.b16 %v79
    %v231 = vunpack.c.l.b16 %v80
    %v232 = vunpack.c.l.b16 %v81
    %v233 = vunpack.c.l.b16 %v82
    %v234 = vunpack.c.l.b16 %v83
    %v235 = vunpack.c.l.b16 %v84
    %v236 = vpack.c.b16 %v221, %v220
    %v237 = vpack.c.b16 %v223, %v222
    %v238 = vpack.c.b16 %v225, %v224
    %v239 = vpack.c.b16 %v227, %v226
    %v240 = vpack.c.b16 %v229, %v228
    %v241 = vpack.c.b16 %v231, %v230
    %v242 = vpack.c.b16 %v233, %v232
    %v243 = vpack.c.b16 %v235, %v234
    %252 = vmatprep.subr.bf16.mxu0 0
    %253 = vmatpush1.bf16.msra.mxu0 %v236
    %254 = vmatprep.subr.bf16.mxu0 0
    %255 = vmatpush1.bf16.msra.mxu0 %v237
    %256 = vmatprep.subr.bf16.mxu0 0
    %257 = vmatpush1.bf16.msra.mxu0 %v238
    %258 = vmatprep.subr.bf16.mxu0 0
    %259 = vmatpush1.bf16.msra.mxu0 %v239
    %260 = vmatprep.subr.bf16.mxu0 0
    %261 = vmatpush1.bf16.msra.mxu0 %v240
    %262 = vmatprep.subr.bf16.mxu0 0
    %263 = vmatpush1.bf16.msra.mxu0 %v241
    %264 = vmatprep.subr.bf16.mxu0 0
    %265 = vmatpush1.bf16.msra.mxu0 %v242
    %266 = vmatprep.subr.bf16.mxu0 0
    %267 = vmatpush1.bf16.msra.mxu0 %v243
    %268 = vmatprep.subr.bf16.mxu0 0
    %269 = vmatpush1.bf16.msra.mxu0 0
    %270 = vmatprep.subr.bf16.mxu0 0
    %271 = vmatpush1.bf16.msra.mxu0 0
    %272 = vmatprep.subr.bf16.mxu0 0
    %273 = vmatpush1.bf16.msra.mxu0 0
    %274 = vmatprep.subr.bf16.mxu0 0
    %275 = vmatpush1.bf16.msra.mxu0 0
    %276 = vmatprep.subr.bf16.mxu0 0
    %277 = vmatpush1.bf16.msra.mxu0 0
    %278 = vmatprep.subr.bf16.mxu0 0
    %279 = vmatpush1.bf16.msra.mxu0 0
    %280 = vmatprep.subr.bf16.mxu0 0
    %281 = vmatpush1.bf16.msra.mxu0 0
    %282 = vmatprep.subr.bf16.mxu0 0
    %283 = vmatpush1.bf16.msra.mxu0 0
    %284 = vmatprep.mubr.bf16.mxu0 0
    %285 = vmatmul.mubr.bf16.gmra.mrb[0].mxu0 %v199
    %v286 = vpop.f32.mrb[0].mxu0
    %v287 = vadd.f32 %v203, %v286
    %v288 = vpop.f32.mrb[0].mxu0
    %v289 = vpop.f32.mrb[0].mxu0
    %v290 = vpop.f32.mrb[0].mxu0
    %291 = vdwg.mxu0
    %v292 = vtanh.pop %v287
    %v293 = vpack.c.bf16 %v292, %v292
    %v294 = vlaneseq
    %v295 = vshrl.u32 %v294, 7
    %v296 = vsub.s32 0, %v295
    %v297 = vrot.slane %v103, %v296
    %v314 = vunpack.c.l.b16 %v85
    %v315 = vunpack.c.l.b16 %v86
    %v316 = vunpack.c.l.b16 %v87
    %v317 = vunpack.c.l.b16 %v88
    %v318 = vunpack.c.l.b16 %v89
    %v319 = vunpack.c.l.b16 %v90
    %v320 = vunpack.c.l.b16 %v91
    %v321 = vunpack.c.l.b16 %v92
    %v322 = vunpack.c.l.b16 %v93
    %v323 = vunpack.c.l.b16 %v94
    %v324 = vunpack.c.l.b16 %v95
    %v325 = vunpack.c.l.b16 %v96
    %v326 = vunpack.c.l.b16 %v97
    %v327 = vunpack.c.l.b16 %v98
    %v328 = vunpack.c.l.b16 %v99
    %v329 = vunpack.c.l.b16 %v100
    %v330 = vpack.c.b16 %v315, %v314
    %v331 = vpack.c.b16 %v317, %v316
    %v332 = vpack.c.b16 %v319, %v318
    %v333 = vpack.c.b16 %v321, %v320
    %v334 = vpack.c.b16 %v323, %v322
    %v335 = vpack.c.b16 %v325, %v324
    %v336 = vpack.c.b16 %v327, %v326
    %v337 = vpack.c.b16 %v329, %v328
    %346 = vmatprep.subr.bf16.mxu0 0
    %347 = vmatpush1.bf16.msra.mxu0 %v330
    %348 = vmatprep.subr.bf16.mxu0 0
    %349 = vmatpush1.bf16.msra.mxu0 %v331
    %350 = vmatprep.subr.bf16.mxu0 0
    %351 = vmatpush1.bf16.msra.mxu0 %v332
    %352 = vmatprep.subr.bf16.mxu0 0
    %353 = vmatpush1.bf16.msra.mxu0 %v333
    %354 = vmatprep.subr.bf16.mxu0 0
    %355 = vmatpush1.bf16.msra.mxu0 %v334
    %356 = vmatprep.subr.bf16.mxu0 0
    %357 = vmatpush1.bf16.msra.mxu0 %v335
    %358 = vmatprep.subr.bf16.mxu0 0
    %359 = vmatpush1.bf16.msra.mxu0 %v336
    %360 = vmatprep.subr.bf16.mxu0 0
    %361 = vmatpush1.bf16.msra.mxu0 %v337
    %362 = vmatprep.subr.bf16.mxu0 0
    %363 = vmatpush1.bf16.msra.mxu0 0
    %364 = vmatprep.subr.bf16.mxu0 0
    %365 = vmatpush1.bf16.msra.mxu0 0
    %366 = vmatprep.subr.bf16.mxu0 0
    %367 = vmatpush1.bf16.msra.mxu0 0
    %368 = vmatprep.subr.bf16.mxu0 0
    %369 = vmatpush1.bf16.msra.mxu0 0
    %370 = vmatprep.subr.bf16.mxu0 0
    %371 = vmatpush1.bf16.msra.mxu0 0
    %372 = vmatprep.subr.bf16.mxu0 0
    %373 = vmatpush1.bf16.msra.mxu0 0
    %374 = vmatprep.subr.bf16.mxu0 0
    %375 = vmatpush1.bf16.msra.mxu0 0
    %376 = vmatprep.subr.bf16.mxu0 0
    %377 = vmatpush1.bf16.msra.mxu0 0
    %378 = vmatprep.mubr.bf16.mxu0 0
    %379 = vmatmul.mubr.bf16.gmra.mrb[0].mxu0 %v293
    %v380 = vpop.f32.mrb[0].mxu0
    %v381 = vadd.f32 %v297, %v380
    %v382 = vpop.f32.mrb[0].mxu0
    %v383 = vpop.f32.mrb[0].mxu0
    %v384 = vpop.f32.mrb[0].mxu0
    %385 = vdwg.mxu0
    %386 = vst [vmem:[#allocation8] sm:$0xff] %v381
    // Predicated region
    $region26: #{tpu_custom_call.1} parent=1 // pred_check
      _
    $region27: #{tpu_custom_call.1} parent=1 // pred_check_branch
      %388 = sbr.rel (0) target = $region29
    $region28: #{tpu_custom_call.1} parent=1 // pred_region
      %s390 = ssub.s32 128, 128
      %391 = vsyncadd [#allocation4], %s390
      %s393 = sshll.u32 [#allocation8], 4
      %s394 = int_to_ptr.vmem [resolvable:$true] %s393
      %396 = dma.vmem_to_hbm [thread:$0]  %s394, 128, %s3, [#allocation4]
    $region29: #{tpu_custom_call.1} parent=1 // pred_fallthru
      _
    // Predicated region
    $region30: #{tpu_custom_call.1} parent=1 // pred_check
      _
    $region31: #{tpu_custom_call.1} parent=1 // pred_check_branch
      %398 = sbr.rel (0) target = $region33
    $region32: #{tpu_custom_call.1} parent=1 // pred_region
      %399 = dma.done [#allocation4], 128
    $region33: #{tpu_custom_call.1} parent=1 // pred_fallthru
      _
    %400 = vsyncpa [#allocation3], 1
    %401 = vsyncpa [#allocation6], 1
    %402 = vsyncpa [#allocation4], 1

</llo_original>
